<compile_context>
chip_gen: v5e
topology: v5e:2x2
jax: 0.10.0
libtpu: 0.0.40
codegen_flags: <defaults>
</compile_context>

<pallas_src>
import functools

import jax
import jax.numpy as jnp
from jax.experimental import pallas as pl
from jax.experimental.pallas import tpu as pltpu


def _round_up(x, m):
    return ((x + m - 1) // m) * m


# ---------------------------------------------------------------------------
# Kernel 1: single-pass matmul with fused shift / residual / ReLU epilogue.
#   O (Cout_p, tn) = W (Cout_p, Kp) @ X^T (Kp, tn) + shift [+ residual], ReLU?
#   bf16 operands, f32 accumulation, f32 epilogue.
# ---------------------------------------------------------------------------
def _fused_matmul_kernel(*refs, apply_relu, has_residual):
    if has_residual:
        w_ref, x_ref, shift_ref, res_ref, o_ref = refs
    else:
        w_ref, x_ref, shift_ref, o_ref = refs
        res_ref = None

    y = jnp.dot(w_ref[...], x_ref[...], preferred_element_type=jnp.float32)
    y = y + shift_ref[...]                     # (Cout_p, 1) broadcast over lanes
    if has_residual:
        y = y + res_ref[...]
    if apply_relu:
        y = jnp.maximum(y, 0.0)
    o_ref[...] = y.astype(o_ref.dtype)


def fused_matmul_t(w, xT, shift, residual=None, apply_relu=False):
    """O (Cout, M) = relu?( w (Cout,K) @ xT (K,M) + shift[:,None] [+ residual] )."""
    Cout, K = w.shape
    K2, M = xT.shape
    assert K == K2

    Cp = _round_up(Cout, 8)
    Kp = _round_up(K, 8)
    Mp = _round_up(M, 128)
    # Largest lane tile (multiple of 128, <=1024) that divides Mp -> padding <=127.
    q = Mp // 128
    tn = 128
    for cand in (8, 4, 2):
        if q % cand == 0:
            tn = 128 * cand
            break

    wp = jnp.pad(w, ((0, Cp - Cout), (0, Kp - K))).astype(jnp.bfloat16)
    xp = jnp.pad(xT.astype(jnp.bfloat16), ((0, Kp - K), (0, Mp - M)))
    shp = jnp.pad(shift.astype(jnp.float32).reshape(Cout, 1),
                  ((0, Cp - Cout), (0, 0)))

    in_specs = [
        pl.BlockSpec((Cp, Kp), lambda j: (0, 0)),    # weights, resident
        pl.BlockSpec((Kp, tn), lambda j: (0, j)),    # activation patches
        pl.BlockSpec((Cp, 1), lambda j: (0, 0)),     # per-channel shift
    ]
    operands = [wp, xp, shp]
    has_residual = residual is not None
    if has_residual:
        rp = jnp.pad(residual.astype(jnp.float32),
                     ((0, Cp - Cout), (0, Mp - M)))
        in_specs.append(pl.BlockSpec((Cp, tn), lambda j: (0, j)))
        operands.append(rp)

    out = pl.pallas_call(
        functools.partial(_fused_matmul_kernel, apply_relu=apply_relu,
                          has_residual=has_residual),
        out_shape=jax.ShapeDtypeStruct((Cp, Mp), jnp.float32),
        grid=(Mp // tn,),
        in_specs=in_specs,
        out_specs=pl.BlockSpec((Cp, tn), lambda j: (0, j)),
        compiler_params=pltpu.CompilerParams(
            dimension_semantics=("parallel",)),
    )(*operands)
    return out[:Cout, :M]


# ---------------------------------------------------------------------------
# Kernel 2: gridded max-reduce over the leading axis (3x3 stride-2 max pool).
# ---------------------------------------------------------------------------
def _max_reduce_kernel(x_ref, o_ref):
    o_ref[...] = jnp.max(x_ref[...], axis=0)


def max_pool_2d_cm(x, kernel=3, stride=2, pad=1):
    """Max pool on channel-major (C, N, H, W) activations."""
    C, N, H, W = x.shape
    OH = (H + 2 * pad - kernel) // stride + 1
    OW = (W + 2 * pad - kernel) // stride + 1
    neg = float(jnp.finfo(x.dtype).min)
    xp = jnp.pad(x, ((0, 0), (0, 0), (pad, pad), (pad, pad)),
                 constant_values=neg)
    views = []
    for ky in range(kernel):
        for kx in range(kernel):
            views.append(xp[:, :,
                            ky:ky + stride * (OH - 1) + 1:stride,
                            kx:kx + stride * (OW - 1) + 1:stride])
    stacked = jnp.stack(views, axis=0).reshape(kernel * kernel, -1)
    L = stacked.shape[1]
    rows = pl.cdiv(L, 128)
    tr = min(256, _round_up(rows, 8))
    rows_p = _round_up(rows, tr)
    Lp = rows_p * 128
    stacked = jnp.pad(stacked, ((0, 0), (0, Lp - L)), constant_values=neg)
    stacked = stacked.reshape(kernel * kernel, rows_p, 128)

    out = pl.pallas_call(
        _max_reduce_kernel,
        out_shape=jax.ShapeDtypeStruct((rows_p, 128), x.dtype),
        grid=(rows_p // tr,),
        in_specs=[pl.BlockSpec((kernel * kernel, tr, 128), lambda i: (0, i, 0))],
        out_specs=pl.BlockSpec((tr, 128), lambda i: (i, 0)),
        compiler_params=pltpu.CompilerParams(
            dimension_semantics=("parallel",)),
    )(stacked)
    return out.reshape(-1)[:L].reshape(C, N, OH, OW)


# ---------------------------------------------------------------------------
# Kernel 3: gridded global average pooling (AdaptiveAvgPool2d((1, 1))).
# ---------------------------------------------------------------------------
def _avg_pool_kernel(x_ref, o_ref, *, inv_hw):
    o_ref[...] = jnp.sum(x_ref[...], axis=1, keepdims=True) * inv_hw


def global_avg_pool_cm(x):
    """(C, N, H, W) -> (C, N) mean over spatial dims."""
    C, N, H, W = x.shape
    hw = H * W
    flat = x.reshape(C * N, hw)
    R = C * N
    tr = min(256, _round_up(R, 8))
    Rp = _round_up(R, tr)
    HWp = _round_up(hw, 128)
    xp = jnp.pad(flat, ((0, Rp - R), (0, HWp - hw)))   # zero-pad: sum unaffected
    out = pl.pallas_call(
        functools.partial(_avg_pool_kernel, inv_hw=1.0 / hw),
        out_shape=jax.ShapeDtypeStruct((Rp, 1), jnp.float32),
        grid=(Rp // tr,),
        in_specs=[pl.BlockSpec((tr, HWp), lambda i: (i, 0))],
        out_specs=pl.BlockSpec((tr, 1), lambda i: (i, 0)),
        compiler_params=pltpu.CompilerParams(
            dimension_semantics=("parallel",)),
    )(xp)
    return out[:R, 0].reshape(C, N)


# ---------------------------------------------------------------------------
# Layer wrappers (channel-major im2col layout plumbing + fused matmul kernel).
# ---------------------------------------------------------------------------
def _im2col_t(x, kh, kw, stride, pad):
    """x (C, N, H, W) -> patches^T (kh*kw*C, N*OH*OW)."""
    C, N, H, W = x.shape
    OH = (H + 2 * pad - kh) // stride + 1
    OW = (W + 2 * pad - kw) // stride + 1
    if pad:
        x = jnp.pad(x, ((0, 0), (0, 0), (pad, pad), (pad, pad)))
    if kh == 1 and kw == 1:
        v = x[:, :, ::stride, ::stride]
        return v.reshape(C, N * OH * OW), OH, OW
    rows = []
    for ky in range(kh):
        for kx in range(kw):
            v = x[:, :,
                  ky:ky + stride * (OH - 1) + 1:stride,
                  kx:kx + stride * (OW - 1) + 1:stride]
            rows.append(v.reshape(C, N * OH * OW))
    return jnp.concatenate(rows, axis=0), OH, OW


def conv2d_cm(x, w, b, bn=None, *, stride, padding, relu=False, residual=None):
    """Conv2d (+ folded inference BN) (+ residual) (+ ReLU) on channel-major input.

    x: (Cin, N, H, W);  w: (Cout, Cin, kh, kw) (PyTorch layout).
    Returns (Cout, N*OH*OW) plus (OH, OW).
    """
    Cout, Cin, kh, kw = w.shape
    xT, OH, OW = _im2col_t(x.astype(jnp.bfloat16), kh, kw, stride, padding)
    Wm = w.transpose(0, 2, 3, 1).reshape(Cout, kh * kw * Cin)   # rows: (ky,kx,ci)
    if bn is None:
        scale = jnp.ones((Cout,), jnp.float32)
        shift = b
    else:
        scale = bn["gamma"] * jax.lax.rsqrt(bn["var"] + 1e-5)
        shift = scale * (b - bn["mean"]) + bn["beta"]
    Wm = Wm * scale[:, None]        # fold BN scale into the weights (wrapper-side)
    y = fused_matmul_t(Wm, xT, shift, residual=residual, apply_relu=relu)
    return y, OH, OW


def residual_block(x, p):
    """x: (Cin, N, H, W) channel-major."""
    _, N, _, _ = x.shape
    stride = p["stride"]
    # identity = conv3(x)  (1x1, no BN)
    identity, _, _ = conv2d_cm(x, p["conv3_w"], p["conv3_b"], None,
                               stride=stride, padding=0, relu=False)
    # out = relu(bn1(conv1(x)))
    out1, oh, ow = conv2d_cm(x, p["conv1_w"], p["conv1_b"], p["bn1"],
                             stride=stride, padding=1, relu=True)
    out1 = out1.reshape(p["conv1_w"].shape[0], N, oh, ow)
    # out = relu(bn2(conv2(out)) + identity)   (residual + relu fused in epilogue)
    out2, oh, ow = conv2d_cm(out1, p["conv2_w"], p["conv2_b"], p["bn2"],
                             stride=1, padding=1, relu=True, residual=identity)
    return out2.reshape(p["conv2_w"].shape[0], N, oh, ow)


def resnet_forward(x_nchw, params):
    N = x_nchw.shape[0]
    x = jnp.transpose(x_nchw, (1, 0, 2, 3))       # one-time NCHW -> (C, N, H, W)
    # first: conv7x7 s2 p3 + BN + ReLU + maxpool 3x3 s2 p1
    y, oh, ow = conv2d_cm(x, params["first"]["conv_w"], params["first"]["conv_b"],
                          params["first"]["bn"], stride=2, padding=3, relu=True)
    y = y.reshape(params["first"]["conv_w"].shape[0], N, oh, ow)
    y = max_pool_2d_cm(y, 3, 2, 1)
    # block layers
    for layer in ("layer1", "layer2"):
        for bp in params[layer]:
            y = residual_block(y, bp)
    # last: adaptive avg pool (1,1) + flatten + linear
    pooled = global_avg_pool_cm(y)                                 # (C, N)
    logits_t = fused_matmul_t(params["fc_w"], pooled, params["fc_b"])  # (classes, N)
    return logits_t.T                                              # (N, classes)


# ---------------------------------------------------------------------------
# Parameter initialization (deterministic, PyTorch-layout weights).
# ---------------------------------------------------------------------------
def _init_bn(key, c):
    k1, k2, k3, k4 = jax.random.split(key, 4)
    return dict(
        gamma=1.0 + 0.1 * jax.random.normal(k1, (c,), jnp.float32),
        beta=0.1 * jax.random.normal(k2, (c,), jnp.float32),
        mean=0.1 * jax.random.normal(k3, (c,), jnp.float32),
        var=jax.random.uniform(k4, (c,), jnp.float32, 0.5, 1.5),
    )


def _init_conv(key, cout, cin, kh, kw):
    k1, k2 = jax.random.split(key)
    fan_in = cin * kh * kw
    w = jax.random.normal(k1, (cout, cin, kh, kw), jnp.float32) / jnp.sqrt(fan_in)
    b = 0.1 * jax.random.normal(k2, (cout,), jnp.float32)
    return w, b


def _init_block(key, cin, cmid, cout, stride):
    ks = jax.random.split(key, 5)
    c1w, c1b = _init_conv(ks[0], cmid, cin, 3, 3)
    c2w, c2b = _init_conv(ks[1], cout, cmid, 3, 3)
    c3w, c3b = _init_conv(ks[2], cout, cin, 1, 1)
    return dict(conv1_w=c1w, conv1_b=c1b, bn1=_init_bn(ks[3], cmid),
                conv2_w=c2w, conv2_b=c2b, bn2=_init_bn(ks[4], cout),
                conv3_w=c3w, conv3_b=c3b, stride=stride)


def init_resnet_params(key, in_channels, num_blocks, layer1_channel,
                       layer2_channel, out_channel, num_classes):
    ks = jax.random.split(key, 6)
    cw, cb = _init_conv(ks[0], layer1_channel, in_channels, 7, 7)
    params = {"first": dict(conv_w=cw, conv_b=cb,
                            bn=_init_bn(ks[1], layer1_channel))}

    def make_layer(key, n, cin, cout):
        keys = jax.random.split(key, n)
        stride = 2 if cin != cout else 1
        blocks = [_init_block(keys[0], cin, cout, cout, stride)]
        for i in range(1, n):
            blocks.append(_init_block(keys[i], cout, cout, cout, 1))
        return blocks

    params["layer1"] = make_layer(ks[2], num_blocks, layer1_channel, layer2_channel)
    params["layer2"] = make_layer(ks[3], num_blocks, layer2_channel, out_channel)
    params["fc_w"] = 0.1 * jax.random.normal(ks[4], (num_classes, out_channel),
                                             jnp.float32)
    params["fc_b"] = 0.1 * jax.random.normal(ks[5], (num_classes,), jnp.float32)
    return params


# ---------------------------------------------------------------------------
# Pure-JAX reference forward (f32, for correctness checking only).
# ---------------------------------------------------------------------------
def _ref_conv(x, w, b, stride, padding):
    y = jax.lax.conv_general_dilated(
        x, w, (stride, stride), [(padding, padding), (padding, padding)],
        dimension_numbers=("NCHW", "OIHW", "NCHW"),
        precision=jax.lax.Precision.HIGHEST)
    return y + b[None, :, None, None]


def _ref_bn(x, bn):
    s = bn["gamma"] / jnp.sqrt(bn["var"] + 1e-5)
    return x * s[None, :, None, None] + (bn["beta"] - s * bn["mean"])[None, :, None, None]


def _ref_block(x, p):
    identity = _ref_conv(x, p["conv3_w"], p["conv3_b"], p["stride"], 0)
    out = jax.nn.relu(_ref_bn(
        _ref_conv(x, p["conv1_w"], p["conv1_b"], p["stride"], 1), p["bn1"]))
    out = _ref_bn(_ref_conv(out, p["conv2_w"], p["conv2_b"], 1, 1), p["bn2"])
    return jax.nn.relu(out + identity)


def resnet_reference(x, params):
    y = jax.nn.relu(_ref_bn(
        _ref_conv(x, params["first"]["conv_w"], params["first"]["conv_b"], 2, 3),
        params["first"]["bn"]))
    y = jax.lax.reduce_window(y, -jnp.inf, jax.lax.max, (1, 1, 3, 3),
                              (1, 1, 2, 2), [(0, 0), (0, 0), (1, 1), (1, 1)])
    for layer in ("layer1", "layer2"):
        for p in params[layer]:
            y = _ref_block(y, p)
    pooled = jnp.mean(y, axis=(2, 3))
    return pooled @ params["fc_w"].T + params["fc_b"]


if __name__ == "__main__":
    key = jax.random.PRNGKey(0)
    kx, kp = jax.random.split(key)

    # ResNet(num_blocks=2, layer1_channel=8, layer2_channel=16, out_channel=32,
    #        num_classes=4) on an NCHW input (2, 4, 16, 16).
    x = jax.random.normal(kx, (2, 4, 16, 16), dtype=jnp.float32)
    num_blocks, l1c, l2c, outc, num_classes = 2, 8, 16, 32, 4
    params = init_resnet_params(kp, 4, num_blocks, l1c, l2c, outc, num_classes)

    logits = jax.block_until_ready(resnet_forward(x, params))
    assert logits.shape == (2, num_classes), logits.shape
    assert bool(jnp.all(jnp.isfinite(logits)))

    ref = jax.block_until_ready(resnet_reference(x, params))
    err = float(jnp.max(jnp.abs(logits - ref)))
    scale = max(1.0, float(jnp.max(jnp.abs(ref))))
    # bf16 MXU inputs with f32 accumulation: allow 5% of the logit magnitude.
    assert err <= 5e-2 * scale, f"mismatch vs pure-JAX reference: {err} (scale {scale})"

    print("KERNEL_OK")
</pallas_src>

<mosaic_0001>
module attributes {stable_mosaic.version = 11 : i64} {
  func.func @_fused_matmul_kernel(%arg0: i32, %arg1: memref<8x200xbf16, #tpu.memory_space<vmem>>, %arg2: memref<200x128xbf16, #tpu.memory_space<vmem>>, %arg3: memref<8x1xf32, #tpu.memory_space<vmem>>, %arg4: memref<8x128xf32, #tpu.memory_space<vmem>>) attributes {dimension_semantics = [#tpu.dimension_semantics<parallel>], iteration_bounds = array<i64: 1>, scalar_prefetch = 0 : i64, scratch_operands = 0 : i64, tpu.core_type = #tpu.core_type<tc>, window_params = [{pipeline_mode = #tpu.pipeline_mode<synchronous>, transform_indices = @transform_0, window_bounds = array<i64: 8, 200>}, {transform_indices = @transform_1, window_bounds = array<i64: 200, 128>}, {pipeline_mode = #tpu.pipeline_mode<synchronous>, transform_indices = @transform_2, window_bounds = array<i64: 8, 1>}, {transform_indices = @transform_3, window_bounds = array<i64: 8, 128>}]} {
    %c0 = arith.constant 0 : index
    %c0_0 = arith.constant 0 : index
    %0 = vector.load %arg1[%c0, %c0_0] : memref<8x200xbf16, #tpu.memory_space<vmem>>, vector<8x200xbf16>
    %c0_1 = arith.constant 0 : index
    %c0_2 = arith.constant 0 : index
    %1 = vector.load %arg2[%c0_1, %c0_2] : memref<200x128xbf16, #tpu.memory_space<vmem>>, vector<200x128xbf16>
    %cst = arith.constant dense<0.000000e+00> : vector<8x128xf32>
    %2 = tpu.matmul %0, %1, %cst {dimension_numbers = #tpu.dot_dimension_numbers<[1], [0], [0], [1], [0, 0, 1, 1], [], []>} : vector<8x200xbf16>, vector<200x128xbf16>, vector<8x128xf32> -> vector<8x128xf32>
    %c0_3 = arith.constant 0 : index
    %c0_4 = arith.constant 0 : index
    %3 = vector.load %arg3[%c0_3, %c0_4] : memref<8x1xf32, #tpu.memory_space<vmem>>, vector<8x1xf32>
    %4 = vector.broadcast %3 : vector<8x1xf32> to vector<8x128xf32>
    %5 = arith.addf %2, %4 : vector<8x128xf32>
    %cst_5 = arith.constant 0.000000e+00 : f32
    %6 = vector.broadcast %cst_5 : f32 to vector<8x128xf32>
    %7 = arith.maximumf %5, %6 : vector<8x128xf32>
    %c0_6 = arith.constant 0 : index
    %c0_7 = arith.constant 0 : index
    %8 = vector.load %arg4[%c0_6, %c0_7] : memref<8x128xf32, #tpu.memory_space<vmem>>, vector<8x128xf32>
    tpu.vector_store %arg4[%c0_6, %c0_7], %7 {strides = array<i32>} : memref<8x128xf32, #tpu.memory_space<vmem>>, vector<8x128xf32>,
    return
  }
  func.func @transform_0(%arg0: i32) -> (i32, i32) {
    %c0_i32 = arith.constant 0 : i32
    %c0_i32_0 = arith.constant 0 : i32
    %c0_i32_1 = arith.constant 0 : i32
    return %c0_i32, %c0_i32_0 : i32, i32
  }
  func.func @transform_1(%arg0: i32) -> (i32, i32) {
    %c0_i32 = arith.constant 0 : i32
    %c0_i32_0 = arith.constant 0 : i32
    return %c0_i32, %arg0 : i32, i32
  }
  func.func @transform_2(%arg0: i32) -> (i32, i32) {
    %c0_i32 = arith.constant 0 : i32
    %c0_i32_0 = arith.constant 0 : i32
    %c0_i32_1 = arith.constant 0 : i32
    return %c0_i32, %c0_i32_0 : i32, i32
  }
  func.func @transform_3(%arg0: i32) -> (i32, i32) {
    %c0_i32 = arith.constant 0 : i32
    %c0_i32_0 = arith.constant 0 : i32
    return %c0_i32, %arg0 : i32, i32
  }
}

</mosaic_0001>

<llo_original>
// kernel: tpu_custom_call.1
$region0: #{tpu_custom_call.1}
  #allocation0 [shape = 'u32[]', space=smem, size = 0x4, offset = 0x4, fixed_abs, tag = 'smem constant byte address 0x4 - core index']
  #allocation1 [shape = 'u32[72,128]{1,0:T(1,128)}', space=vmem, size = 0x9000, scoped, tag = 'internal scratch']
  %s0 = inlined_call_operand.vmem [shape: bf16[8,200], index: 0, kind: input, shape index: {}]
  %s1 = inlined_call_operand.hbm [shape: bf16[200,128], index: 1, kind: input, shape index: {}]
  %s2 = inlined_call_operand.vmem [shape: f32[8,1], index: 2, kind: input, shape index: {}]
  %s3 = inlined_call_operand.hbm [shape: f32[8,128], index: 3, kind: output, shape index: {}]
  %s4 = sld [smem:[#allocation0]]
  $region26: #{tpu_custom_call.1} parent=0
    _
  %s6 = ssub.s32 1, %s4
  %s7 = scalar_select 0, %s6, %s4
  $region1: #{tpu_custom_call.1} parent=0
    #allocation2 [shape = 'u8[51200]{0}', space=vmem, size = 0xc800, scoped, tag = 'input window, operand 1, single buffered']
    #allocation3 [shape = 's32[1]{0}', space=sflag, size = 0x4, scoped, tag = 'scoped memory for tpu_custom_call.1']
    #allocation4 [shape = 's32[1]{0}', space=sflag, size = 0x4, scoped, tag = 'scoped memory for tpu_custom_call.1']
    #allocation5 [shape = 'u8[4096]{0}', space=vmem, size = 0x1000, scoped, tag = 'output window, operand 0, single buffered']
    %8 = vsyncpa [#allocation3], 0
    %9 = vsyncpa [#allocation4], 0
    // Predicated region
    $region2: #{tpu_custom_call.1} parent=1 // pred_check
      _
    $region3: #{tpu_custom_call.1} parent=1 // pred_check_branch
      %11 = sbr.rel (0) target = $region5
    $region4: #{tpu_custom_call.1} parent=1 // pred_region
      _
    $region5: #{tpu_custom_call.1} parent=1 // pred_fallthru
      _
    // Predicated region
    $region6: #{tpu_custom_call.1} parent=1 // pred_check
      _
    $region7: #{tpu_custom_call.1} parent=1 // pred_check_branch
      %13 = sbr.rel (0) target = $region9
    $region8: #{tpu_custom_call.1} parent=1 // pred_region
      %15 = vsyncadd [#allocation3], 0
      %s16 = sshll.u32 %s1, 4
      %s17 = int_to_ptr.hbm [resolvable:$true] %s16
      %s18 = sshll.u32 [#allocation2], 4
      %s19 = int_to_ptr.vmem [resolvable:$true] %s18
      %24 = dma.hbm_to_vmem [thread:$0]  %s17, 1600, %s19, [#allocation3], 64, 64, 4
    $region9: #{tpu_custom_call.1} parent=1 // pred_fallthru
      _
    // Predicated region
    $region10: #{tpu_custom_call.1} parent=1 // pred_check
      _
    $region11: #{tpu_custom_call.1} parent=1 // pred_check_branch
      %26 = sbr.rel (0) target = $region13
    $region12: #{tpu_custom_call.1} parent=1 // pred_region
      _
    $region13: #{tpu_custom_call.1} parent=1 // pred_fallthru
      _
    // Predicated region
    $region14: #{tpu_custom_call.1} parent=1 // pred_check
      _
    $region15: #{tpu_custom_call.1} parent=1 // pred_check_branch
      %28 = sbr.rel (0) target = $region17
    $region16: #{tpu_custom_call.1} parent=1 // pred_region
      %30 = dma.done [#allocation3], 1600
    $region17: #{tpu_custom_call.1} parent=1 // pred_fallthru
      _
    %v32 = vld [vmem:[%s0] sm:$0xff]
    %v33 = vld [vmem:[#allocation2] sm:$0xf]
    %v34 = vld [vmem:[#allocation2 + $0x4] sm:$0xf]
    %v35 = vld [vmem:[#allocation2 + $0x8] sm:$0xf]
    %v36 = vld [vmem:[#allocation2 + $0xc] sm:$0xf]
    %v37 = vld [vmem:[#allocation2 + $0x10] sm:$0xf]
    %v38 = vld [vmem:[#allocation2 + $0x14] sm:$0xf]
    %v39 = vld [vmem:[#allocation2 + $0x18] sm:$0xf]
    %v40 = vld [vmem:[#allocation2 + $0x1c] sm:$0xf]
    %v41 = vld [vmem:[#allocation2 + $0x20] sm:$0xf]
    %v42 = vld [vmem:[#allocation2 + $0x24] sm:$0xf]
    %v43 = vld [vmem:[#allocation2 + $0x28] sm:$0xf]
    %v44 = vld [vmem:[#allocation2 + $0x2c] sm:$0xf]
    %v45 = vld [vmem:[#allocation2 + $0x30] sm:$0xf]
    %v46 = vld [vmem:[#allocation2 + $0x34] sm:$0xf]
    %v47 = vld [vmem:[#allocation2 + $0x38] sm:$0xf]
    %v48 = vld [vmem:[#allocation2 + $0x3c] sm:$0xf]
    %v49 = vld [vmem:[#allocation2 + $0x40] sm:$0xf]
    %v50 = vld [vmem:[#allocation2 + $0x44] sm:$0xf]
    %v51 = vld [vmem:[#allocation2 + $0x48] sm:$0xf]
    %v52 = vld [vmem:[#allocation2 + $0x4c] sm:$0xf]
    %v53 = vld [vmem:[#allocation2 + $0x50] sm:$0xf]
    %v54 = vld [vmem:[#allocation2 + $0x54] sm:$0xf]
    %v55 = vld [vmem:[#allocation2 + $0x58] sm:$0xf]
    %v56 = vld [vmem:[#allocation2 + $0x5c] sm:$0xf]
    %v57 = vld [vmem:[#allocation2 + $0x60] sm:$0xf]
    %v58 = vld [vmem:[%s2] sm:$0xff]
    %60 = vset.pattern.permute.xlu0 0
    %61 = vperm.xlu0 %60, %v58
    %v62 = vpop.permute.xlu0 %61
    %v65 = vunpack.c.l.b16 %v32
    %v66 = vunpack.c.h.b16 %v32
    %v67 = vpack.c.b16 %v65, %v65
    %v68 = vpack.c.b16 %v66, %v66
    %v95 = vunpack.c.l.b16 %v33
    %v96 = vunpack.c.l.b16 %v34
    %v97 = vunpack.c.l.b16 %v35
    %v98 = vunpack.c.l.b16 %v36
    %v99 = vunpack.c.l.b16 %v37
    %v100 = vunpack.c.l.b16 %v38
    %v101 = vunpack.c.l.b16 %v39
    %v102 = vunpack.c.l.b16 %v40
    %v103 = vunpack.c.l.b16 %v41
    %v104 = vunpack.c.l.b16 %v42
    %v105 = vunpack.c.l.b16 %v43
    %v106 = vunpack.c.l.b16 %v44
    %v107 = vunpack.c.l.b16 %v45
    %v108 = vunpack.c.l.b16 %v46
    %v109 = vunpack.c.l.b16 %v47
    %v110 = vunpack.c.l.b16 %v48
    %v111 = vunpack.c.l.b16 %v49
    %v112 = vunpack.c.l.b16 %v50
    %v113 = vunpack.c.l.b16 %v51
    %v114 = vunpack.c.l.b16 %v52
    %v115 = vunpack.c.l.b16 %v53
    %v116 = vunpack.c.l.b16 %v54
    %v117 = vunpack.c.l.b16 %v55
    %v118 = vunpack.c.l.b16 %v56
    %v119 = vunpack.c.l.b16 %v57
    %v120 = vpack.c.b16 %v96, %v95
    %v121 = vpack.c.b16 %v98, %v97
    %v122 = vpack.c.b16 %v100, %v99
    %v123 = vpack.c.b16 %v102, %v101
    %v124 = vpack.c.b16 %v104, %v103
    %v125 = vpack.c.b16 %v106, %v105
    %v126 = vpack.c.b16 %v108, %v107
    %v127 = vpack.c.b16 %v110, %v109
    %v128 = vpack.c.b16 %v112, %v111
    %v129 = vpack.c.b16 %v114, %v113
    %v130 = vpack.c.b16 %v116, %v115
    %v131 = vpack.c.b16 %v118, %v117
    %v132 = vpack.c.b16 %v119, %v119
    %vm145 = vcmask 588800
    %v147 = vsel %vm145, %v68, 0
    %vm149 = vcmask 1043456
    %v151 = vsel %vm149, %v132, 0
    %153 = vmatpush.bf16.msra.mxu0 %v127
    %154 = vmatpush.bf16.msra.mxu0 %v126
    %155 = vmatpush.bf16.msra.mxu0 %v125
    %156 = vmatpush.bf16.msra.mxu0 %v124
    %157 = vmatpush.bf16.msra.mxu0 %v123
    %158 = vmatpush.bf16.msra.mxu0 %v122
    %159 = vmatpush.bf16.msra.mxu0 %v121
    %160 = vmatpush.bf16.msra.mxu0 %v120
    %161 = vmatmul.bf16.gmra.mxu0 %v67
    %v162 = vpop.f32.mrf.mxu0
    %v163 = vadd.f32 %v62, %v162
    %v164 = vpop.f32.mrf.mxu0
    %165 = vdwg.mxu0
    %166 = vmatpush.bf16.msra.mxu0 0
    %167 = vmatpush.bf16.msra.mxu0 0
    %168 = vmatpush.bf16.msra.mxu0 0
    %169 = vmatpush.bf16.msra.mxu0 %v151
    %170 = vmatpush.bf16.msra.mxu0 %v131
    %171 = vmatpush.bf16.msra.mxu0 %v130
    %172 = vmatpush.bf16.msra.mxu0 %v129
    %173 = vmatpush.bf16.msra.mxu0 %v128
    %174 = vmatmul.bf16.gmra.mxu0 %v147
    %v175 = vpop.f32.mrf.mxu0
    %v176 = vadd.f32 %v163, %v175
    %v177 = vpop.f32.mrf.mxu0
    %178 = vdwg.mxu0
    %v179 = vmax.f32 %v176, 0.0
    %180 = vst [vmem:[#allocation5] sm:$0xff] %v179
    // Predicated region
    $region18: #{tpu_custom_call.1} parent=1 // pred_check
      _
    $region19: #{tpu_custom_call.1} parent=1 // pred_check_branch
      %182 = sbr.rel (0) target = $region21
    $region20: #{tpu_custom_call.1} parent=1 // pred_region
      %184 = vsyncadd [#allocation4], 0
      %s186 = sshll.u32 [#allocation5], 4
      %s187 = int_to_ptr.vmem [resolvable:$true] %s186
      %s188 = sshll.u32 %s3, 4
      %s189 = int_to_ptr.hbm [resolvable:$true] %s188
      %191 = dma.vmem_to_hbm [thread:$0]  %s187, 128, %s189, [#allocation4]
    $region21: #{tpu_custom_call.1} parent=1 // pred_fallthru
      _
    // Predicated region
    $region22: #{tpu_custom_call.1} parent=1 // pred_check
      _
    $region23: #{tpu_custom_call.1} parent=1 // pred_check_branch
      %193 = sbr.rel (0) target = $region25
    $region24: #{tpu_custom_call.1} parent=1 // pred_region
      %195 = dma.done [#allocation4], 128
    $region25: #{tpu_custom_call.1} parent=1 // pred_fallthru
      _
    %196 = vsyncpa [#allocation3], 1
    %197 = vsyncpa [#allocation4], 1

</llo_original>
